<compile_context>
chip_gen: v7x
topology: tpu7x:2x2x1
jax: 0.10.0
libtpu: 0.0.40
codegen_flags: <defaults>
</compile_context>

<pallas_src>
import functools

import jax
import jax.numpy as jnp
from jax.experimental import pallas as pl
from jax.experimental.pallas import tpu as pltpu


def _round_up(x, m):
    return ((x + m - 1) // m) * m


def _sublane(dtype):
    # sublane packing: 8 rows for 4-byte, 16 for 2-byte, 32 for 1-byte dtypes
    return max(8, 32 // jnp.dtype(dtype).itemsize)


def _chip_params():
    """Returns (mxu_m_granularity, num_tensorcores, vmem_cap_bytes)."""
    kind = ""
    try:
        kind = jax.devices()[0].device_kind.lower()
    except Exception:
        pass
    vmem_phys = None
    try:
        vmem_phys = int(pltpu.get_tpu_info().vmem_capacity_bytes)
    except Exception:
        vmem_phys = None
    if vmem_phys is None:
        vmem_phys = (64 << 20) if "v7" in kind else (128 << 20)
    is_v7 = ("v7" in kind) or (vmem_phys <= (64 << 20))
    mxu_m = 128 if "v5" in kind else 256           # v5e: 128x128 MXU passes
    num_tc = 2 if is_v7 else 1                      # v7x: 2 TCs share the grid
    # Leave runtime headroom: ~80% of physical, capped (~51 MiB v7x, 100 MiB else).
    vmem_cap = min((52 << 20) if is_v7 else (100 << 20), int(vmem_phys * 0.8))
    return mxu_m, num_tc, vmem_cap


def _vmem_need_bytes(tm, H, in_b, w_b, out_b, w_bufs, io_bufs):
    return (w_bufs * H * H * w_b                 # resident weight
            + io_bufs * 2 * tm * H * in_b        # x + residual tiles
            + 2 * tm * H * out_b                 # output tile (double-buffered)
            + 3 * H * 4                          # bias / gamma / beta (f32)
            + 6 * tm * H * 4                     # f32 intermediates in the body
            + (2 << 20))                         # margin


def _self_output_kernel(x_ref, res_ref, w_ref, b_ref, gamma_ref, beta_ref,
                        o_ref, *, eps):
    # x_ref/res_ref: (tm, H) native dtype; w_ref: (H_in, H_out) native dtype;
    # b_ref/gamma_ref/beta_ref: (1, H) f32.
    # MXU matmul: native-dtype operands, f32 accumulator.
    h = jnp.dot(x_ref[...], w_ref[...], preferred_element_type=jnp.float32)

    # TODO(synk): dropout omitted (identity in eval / inference mode).

    # bias + residual in f32.
    h = h + b_ref[...].astype(jnp.float32) + res_ref[...].astype(jnp.float32)

    # One-pass LayerNorm statistics: var = E[h^2] - E[h]^2 (f32, clamp >= 0).
    u = jnp.mean(h, axis=-1, keepdims=True)
    s = jnp.maximum(jnp.mean(h * h, axis=-1, keepdims=True) - u * u, 0.0)
    # Fold gamma into the per-row scale; rsqrt goes to the EUP.
    scale = gamma_ref[...].astype(jnp.float32) * jax.lax.rsqrt(s + eps)
    o_ref[...] = ((h - u) * scale
                  + beta_ref[...].astype(jnp.float32)).astype(o_ref.dtype)


def bert_self_output(hidden_states, input_tensor, w_t, b, gamma, beta,
                     *, eps=1e-12, tm=512, input_buffers=None):
    """Fused dense + residual + LayerNorm (BERTSelfOutput, inference).

    hidden_states, input_tensor : (B, S, H)
    w_t                         : (H_in, H_out) -- PyTorch weight.T, transposed
                                  ONCE at weight-load time (not per call).
    b, gamma, beta              : (H,)
    tm                          : requested row tile (auto-tuned per chip).
    input_buffers               : optional buffer count for the x/residual
                                  BlockSpecs (e.g. 3 on v7x); None = default.
    """
    B, S, H = hidden_states.shape
    rows = B * S
    x2 = hidden_states.reshape(rows, H)
    r2 = input_tensor.reshape(rows, H)

    # LayerNorm / bias math is done in f32 regardless of activation dtype.
    b2 = b.astype(jnp.float32).reshape(1, H)
    g2 = gamma.astype(jnp.float32).reshape(1, H)
    be2 = beta.astype(jnp.float32).reshape(1, H)

    mxu_m, num_tc, vmem_cap = _chip_params()
    sub = _sublane(hidden_states.dtype)

    # ---- choose the row tile -------------------------------------------------
    rows_sub = _round_up(rows, sub)
    if rows_sub <= tm:
        if num_tc > 1 and rows_sub >= num_tc * mxu_m:
            # enough work for both v7x TensorCores: one MXU-aligned tile each
            tm = _round_up(pl.cdiv(rows_sub, num_tc), mxu_m)
        else:
            tm = rows_sub
    else:
        gran = mxu_m if rows_sub >= mxu_m else sub
        tm = _round_up(min(tm, rows_sub), gran)
        if num_tc > 1 and rows_sub >= num_tc * gran:
            n = pl.cdiv(rows_sub, tm)
            if n % num_tc != 0:
                target_n = _round_up(n, num_tc)
                for cand in (_round_up(pl.cdiv(rows_sub, target_n), gran),
                             tm - gran):
                    if cand >= gran and pl.cdiv(rows_sub, cand) % num_tc == 0:
                        tm = cand
                        break

    in_b = jnp.dtype(hidden_states.dtype).itemsize
    w_b = jnp.dtype(w_t.dtype).itemsize
    out_b = in_b
    io_bufs = 2 if input_buffers is None else max(2, int(input_buffers))

    # Shrink tm until the footprint (single-buffered weight) fits the VMEM cap.
    while tm > sub and _vmem_need_bytes(tm, H, in_b, w_b, out_b, 1,
                                        io_bufs) > vmem_cap:
        tm = max(sub, _round_up(tm // 2, sub))

    n_steps = pl.cdiv(rows, tm)

    def build(use_pipeline_modes):
        res_kw = {"pipeline_mode": pl.Buffered(1)} if use_pipeline_modes else {}
        in_kw = ({"pipeline_mode": pl.Buffered(int(input_buffers))}
                 if (use_pipeline_modes and input_buffers is not None) else {})
        w_bufs = 1 if use_pipeline_modes else 2
        need = _vmem_need_bytes(tm, H, in_b, w_b, out_b, w_bufs, io_bufs)
        # Never request less VMEM than the estimated footprint.
        vmem_limit = int(max(min(max(need, 32 << 20), vmem_cap), need))
        return pl.pallas_call(
            functools.partial(_self_output_kernel, eps=eps),
            out_shape=jax.ShapeDtypeStruct((rows, H), hidden_states.dtype),
            grid_spec=pltpu.PrefetchScalarGridSpec(
                num_scalar_prefetch=0,
                grid=(n_steps,),
                in_specs=[
                    pl.BlockSpec((tm, H), lambda i: (i, 0), **in_kw),   # x tile
                    pl.BlockSpec((tm, H), lambda i: (i, 0), **in_kw),   # residual
                    pl.BlockSpec((H, H), lambda i: (0, 0), **res_kw),   # weight
                    pl.BlockSpec((1, H), lambda i: (0, 0), **res_kw),   # bias
                    pl.BlockSpec((1, H), lambda i: (0, 0), **res_kw),   # gamma
                    pl.BlockSpec((1, H), lambda i: (0, 0), **res_kw),   # beta
                ],
                out_specs=pl.BlockSpec((tm, H), lambda i: (i, 0)),
            ),
            compiler_params=pltpu.CompilerParams(
                dimension_semantics=("parallel",),
                vmem_limit_bytes=vmem_limit),
        )

    try:
        out2 = build(True)(x2, r2, w_t, b2, g2, be2)
    except Exception:
        # Fallback: plain double-buffered specs (no pipeline_mode overrides).
        out2 = build(False)(x2, r2, w_t, b2, g2, be2)

    # NOTE: rows are fully independent (row-wise LayerNorm), so the masked
    # partial tail block is safe; never add a cross-row op to this kernel.
    return out2.reshape(B, S, H)


def _reference(hidden_states, input_tensor, w, b, gamma, beta, eps=1e-12):
    # w is in PyTorch (out, in) layout.
    h = jnp.einsum("bsh,oh->bso", hidden_states, w) + b
    h = h + input_tensor
    u = jnp.mean(h, axis=-1, keepdims=True)
    s = jnp.mean((h - u) ** 2, axis=-1, keepdims=True)
    h = (h - u) / jnp.sqrt(s + eps)
    return gamma * h + beta


if __name__ == "__main__":
    B, S, H = 2, 8, 32
    key = jax.random.PRNGKey(0)
    k1, k2, k3, k4 = jax.random.split(key, 4)

    hidden_states = jax.random.normal(k1, (B, S, H), dtype=jnp.float32)
    input_tensor = jax.random.normal(k2, (B, S, H), dtype=jnp.float32)

    # Parameters (PyTorch layout), pre-transposed ONCE at "weight load".
    w = jax.random.normal(k3, (H, H), dtype=jnp.float32) * 0.02   # (out, in)
    b = jax.random.normal(k4, (H,), dtype=jnp.float32) * 0.02
    gamma = jnp.ones((H,), dtype=jnp.float32)
    beta = jnp.zeros((H,), dtype=jnp.float32)
    w_t = jnp.asarray(w.T)                                        # (in, out)

    # 1) f32 path.
    out = jax.block_until_ready(
        bert_self_output(hidden_states, input_tensor, w_t, b, gamma, beta))
    ref = _reference(hidden_states, input_tensor, w, b, gamma, beta)
    assert jnp.allclose(out, ref, atol=1e-4, rtol=1e-4), "f32 mismatch"

    # 2) Ragged row count (rows not a multiple of the tile / sublane) ->
    #    exercised via Pallas partial-block masking, no padding.
    B2, S2 = 1, 5
    hs2 = jax.random.normal(jax.random.PRNGKey(1), (B2, S2, H), jnp.float32)
    it2 = jax.random.normal(jax.random.PRNGKey(2), (B2, S2, H), jnp.float32)
    out2 = jax.block_until_ready(
        bert_self_output(hs2, it2, w_t, b, gamma, beta))
    ref2 = _reference(hs2, it2, w, b, gamma, beta)
    assert jnp.allclose(out2, ref2, atol=1e-4, rtol=1e-4), "ragged mismatch"

    # 3) bf16 activations/weight: bf16-in / f32-accumulate matmul, f32 LayerNorm.
    hs3 = hidden_states.astype(jnp.bfloat16)
    it3 = input_tensor.astype(jnp.bfloat16)
    out3 = jax.block_until_ready(
        bert_self_output(hs3, it3, w_t.astype(jnp.bfloat16), b, gamma, beta))
    ref3 = _reference(hs3.astype(jnp.float32), it3.astype(jnp.float32),
                      w, b, gamma, beta)
    assert jnp.allclose(out3.astype(jnp.float32), ref3,
                        atol=3e-2, rtol=3e-2), "bf16 mismatch"

    print("KERNEL_OK")
</pallas_src>

<mosaic_0001>
module attributes {stable_mosaic.version = 11 : i64} {
  func.func @_self_output_kernel(%arg0: i32, %arg1: memref<16x32xf32, #tpu.memory_space<vmem>>, %arg2: memref<16x32xf32, #tpu.memory_space<vmem>>, %arg3: memref<32x32xf32, #tpu.memory_space<vmem>>, %arg4: memref<1x32xf32, #tpu.memory_space<vmem>>, %arg5: memref<1x32xf32, #tpu.memory_space<vmem>>, %arg6: memref<1x32xf32, #tpu.memory_space<vmem>>, %arg7: memref<16x32xf32, #tpu.memory_space<vmem>>) attributes {dimension_semantics = [#tpu.dimension_semantics<parallel>], iteration_bounds = array<i64: 1>, scalar_prefetch = 0 : i64, scratch_operands = 0 : i64, tpu.core_type = #tpu.core_type<tc>, window_params = [{transform_indices = @transform_0, window_bounds = array<i64: 16, 32>}, {transform_indices = @transform_1, window_bounds = array<i64: 16, 32>}, {pipeline_mode = #tpu.pipeline_mode<synchronous>, transform_indices = @transform_2, window_bounds = array<i64: 32, 32>}, {pipeline_mode = #tpu.pipeline_mode<synchronous>, transform_indices = @transform_3, window_bounds = array<i64: 1, 32>}, {pipeline_mode = #tpu.pipeline_mode<synchronous>, transform_indices = @transform_4, window_bounds = array<i64: 1, 32>}, {pipeline_mode = #tpu.pipeline_mode<synchronous>, transform_indices = @transform_5, window_bounds = array<i64: 1, 32>}, {transform_indices = @transform_6, window_bounds = array<i64: 16, 32>}]} {
    %c0 = arith.constant 0 : index
    %c0_0 = arith.constant 0 : index
    %0 = vector.load %arg1[%c0, %c0_0] : memref<16x32xf32, #tpu.memory_space<vmem>>, vector<16x32xf32>
    %c0_1 = arith.constant 0 : index
    %c0_2 = arith.constant 0 : index
    %1 = vector.load %arg3[%c0_1, %c0_2] : memref<32x32xf32, #tpu.memory_space<vmem>>, vector<32x32xf32>
    %cst = arith.constant dense<0.000000e+00> : vector<16x32xf32>
    %2 = tpu.matmul %0, %1, %cst {dimension_numbers = #tpu.dot_dimension_numbers<[1], [0], [0], [1], [0, 0, 1, 1], [], []>} : vector<16x32xf32>, vector<32x32xf32>, vector<16x32xf32> -> vector<16x32xf32>
    %c0_3 = arith.constant 0 : index
    %c0_4 = arith.constant 0 : index
    %3 = vector.load %arg4[%c0_3, %c0_4] : memref<1x32xf32, #tpu.memory_space<vmem>>, vector<1x32xf32>
    %4 = vector.broadcast %3 : vector<1x32xf32> to vector<16x32xf32>
    %5 = arith.addf %2, %4 : vector<16x32xf32>
    %c0_5 = arith.constant 0 : index
    %c0_6 = arith.constant 0 : index
    %6 = vector.load %arg2[%c0_5, %c0_6] : memref<16x32xf32, #tpu.memory_space<vmem>>, vector<16x32xf32>
    %7 = arith.addf %5, %6 : vector<16x32xf32>
    %cst_7 = arith.constant dense<0.000000e+00> : vector<16xf32>
    %8 = vector.multi_reduction <add>, %7, %cst_7 [1] : vector<16x32xf32> to vector<16xf32>
    %9 = vector.shape_cast %8 : vector<16xf32> to vector<16x1xf32>
    %cst_8 = arith.constant 3.200000e+01 : f32
    %10 = vector.broadcast %cst_8 : f32 to vector<16x1xf32>
    %11 = arith.divf %9, %10 : vector<16x1xf32>
    %12 = arith.mulf %7, %7 : vector<16x32xf32>
    %cst_9 = arith.constant dense<0.000000e+00> : vector<16xf32>
    %13 = vector.multi_reduction <add>, %12, %cst_9 [1] : vector<16x32xf32> to vector<16xf32>
    %14 = vector.shape_cast %13 : vector<16xf32> to vector<16x1xf32>
    %cst_10 = arith.constant 3.200000e+01 : f32
    %15 = vector.broadcast %cst_10 : f32 to vector<16x1xf32>
    %16 = arith.divf %14, %15 : vector<16x1xf32>
    %17 = arith.mulf %11, %11 : vector<16x1xf32>
    %18 = arith.subf %16, %17 : vector<16x1xf32>
    %cst_11 = arith.constant 0.000000e+00 : f32
    %19 = vector.broadcast %cst_11 : f32 to vector<16x1xf32>
    %20 = arith.maximumf %18, %19 : vector<16x1xf32>
    %c0_12 = arith.constant 0 : index
    %c0_13 = arith.constant 0 : index
    %21 = vector.load %arg5[%c0_12, %c0_13] : memref<1x32xf32, #tpu.memory_space<vmem>>, vector<1x32xf32>
    %cst_14 = arith.constant 9.99999996E-13 : f32
    %22 = vector.broadcast %cst_14 : f32 to vector<16x1xf32>
    %23 = arith.addf %20, %22 : vector<16x1xf32>
    %24 = math.rsqrt %23 : vector<16x1xf32>
    %25 = vector.broadcast %21 : vector<1x32xf32> to vector<16x32xf32>
    %26 = vector.broadcast %24 : vector<16x1xf32> to vector<16x32xf32>
    %27 = arith.mulf %25, %26 : vector<16x32xf32>
    %28 = vector.broadcast %11 : vector<16x1xf32> to vector<16x32xf32>
    %29 = arith.subf %7, %28 : vector<16x32xf32>
    %30 = arith.mulf %29, %27 : vector<16x32xf32>
    %c0_15 = arith.constant 0 : index
    %c0_16 = arith.constant 0 : index
    %31 = vector.load %arg6[%c0_15, %c0_16] : memref<1x32xf32, #tpu.memory_space<vmem>>, vector<1x32xf32>
    %32 = vector.broadcast %31 : vector<1x32xf32> to vector<16x32xf32>
    %33 = arith.addf %30, %32 : vector<16x32xf32>
    %c0_17 = arith.constant 0 : index
    %c0_18 = arith.constant 0 : index
    %34 = vector.load %arg7[%c0_17, %c0_18] : memref<16x32xf32, #tpu.memory_space<vmem>>, vector<16x32xf32>
    tpu.vector_store %arg7[%c0_17, %c0_18], %33 {strides = array<i32>} : memref<16x32xf32, #tpu.memory_space<vmem>>, vector<16x32xf32>,
    return
  }
  func.func @transform_0(%arg0: i32) -> (i32, i32) {
    %c0_i32 = arith.constant 0 : i32
    %c0_i32_0 = arith.constant 0 : i32
    return %arg0, %c0_i32 : i32, i32
  }
  func.func @transform_1(%arg0: i32) -> (i32, i32) {
    %c0_i32 = arith.constant 0 : i32
    %c0_i32_0 = arith.constant 0 : i32
    return %arg0, %c0_i32 : i32, i32
  }
  func.func @transform_2(%arg0: i32) -> (i32, i32) {
    %c0_i32 = arith.constant 0 : i32
    %c0_i32_0 = arith.constant 0 : i32
    %c0_i32_1 = arith.constant 0 : i32
    return %c0_i32, %c0_i32_0 : i32, i32
  }
  func.func @transform_3(%arg0: i32) -> (i32, i32) {
    %c0_i32 = arith.constant 0 : i32
    %c0_i32_0 = arith.constant 0 : i32
    %c0_i32_1 = arith.constant 0 : i32
    return %c0_i32, %c0_i32_0 : i32, i32
  }
  func.func @transform_4(%arg0: i32) -> (i32, i32) {
    %c0_i32 = arith.constant 0 : i32
    %c0_i32_0 = arith.constant 0 : i32
    %c0_i32_1 = arith.constant 0 : i32
    return %c0_i32, %c0_i32_0 : i32, i32
  }
  func.func @transform_5(%arg0: i32) -> (i32, i32) {
    %c0_i32 = arith.constant 0 : i32
    %c0_i32_0 = arith.constant 0 : i32
    %c0_i32_1 = arith.constant 0 : i32
    return %c0_i32, %c0_i32_0 : i32, i32
  }
  func.func @transform_6(%arg0: i32) -> (i32, i32) {
    %c0_i32 = arith.constant 0 : i32
    %c0_i32_0 = arith.constant 0 : i32
    return %arg0, %c0_i32 : i32, i32
  }
}

module attributes {stable_mosaic.version = 11 : i64} {
  func.func @_self_output_kernel(%arg0: i32, %arg1: memref<16x32xf32, #tpu.memory_space<vmem>>, %arg2: memref<16x32xf32, #tpu.memory_space<vmem>>, %arg3: memref<32x32xf32, #tpu.memory_space<vmem>>, %arg4: memref<1x32xf32, #tpu.memory_space<vmem>>, %arg5: memref<1x32xf32, #tpu.memory_space<vmem>>, %arg6: memref<1x32xf32, #tpu.memory_space<vmem>>, %arg7: memref<16x32xf32, #tpu.memory_space<vmem>>) attributes {dimension_semantics = [#tpu.dimension_semantics<parallel>], iteration_bounds = array<i64: 1>, scalar_prefetch = 0 : i64, scratch_operands = 0 : i64, tpu.core_type = #tpu.core_type<tc>, window_params = [{transform_indices = @transform_0, window_bounds = array<i64: 16, 32>}, {transform_indices = @transform_1, window_bounds = array<i64: 16, 32>}, {pipeline_mode = #tpu.pipeline_mode<synchronous>, transform_indices = @transform_2, window_bounds = array<i64: 32, 32>}, {pipeline_mode = #tpu.pipeline_mode<synchronous>, transform_indices = @transform_3, window_bounds = array<i64: 1, 32>}, {pipeline_mode = #tpu.pipeline_mode<synchronous>, transform_indices = @transform_4, window_bounds = array<i64: 1, 32>}, {pipeline_mode = #tpu.pipeline_mode<synchronous>, transform_indices = @transform_5, window_bounds = array<i64: 1, 32>}, {transform_indices = @transform_6, window_bounds = array<i64: 16, 32>}]} {
    %c0 = arith.constant 0 : index
    %c0_0 = arith.constant 0 : index
    %0 = vector.load %arg1[%c0, %c0_0] : memref<16x32xf32, #tpu.memory_space<vmem>>, vector<16x32xf32>
    %c0_1 = arith.constant 0 : index
    %c0_2 = arith.constant 0 : index
    %1 = vector.load %arg3[%c0_1, %c0_2] : memref<32x32xf32, #tpu.memory_space<vmem>>, vector<32x32xf32>
    %cst = arith.constant dense<0.000000e+00> : vector<16x32xf32>
    %2 = tpu.matmul %0, %1, %cst {dimension_numbers = #tpu.dot_dimension_numbers<[1], [0], [0], [1], [0, 0, 1, 1], [], []>} : vector<16x32xf32>, vector<32x32xf32>, vector<16x32xf32> -> vector<16x32xf32>
    %c0_3 = arith.constant 0 : index
    %c0_4 = arith.constant 0 : index
    %3 = vector.load %arg4[%c0_3, %c0_4] : memref<1x32xf32, #tpu.memory_space<vmem>>, vector<1x32xf32>
    %4 = vector.broadcast %3 : vector<1x32xf32> to vector<16x32xf32>
    %5 = arith.addf %2, %4 : vector<16x32xf32>
    %c0_5 = arith.constant 0 : index
    %c0_6 = arith.constant 0 : index
    %6 = vector.load %arg2[%c0_5, %c0_6] : memref<16x32xf32, #tpu.memory_space<vmem>>, vector<16x32xf32>
    %7 = arith.addf %5, %6 : vector<16x32xf32>
    %cst_7 = arith.constant dense<0.000000e+00> : vector<16xf32>
    %8 = vector.multi_reduction <add>, %7, %cst_7 [1] : vector<16x32xf32> to vector<16xf32>
    %9 = vector.shape_cast %8 : vector<16xf32> to vector<16x1xf32>
    %cst_8 = arith.constant 3.200000e+01 : f32
    %10 = vector.broadcast %cst_8 : f32 to vector<16x1xf32>
    %11 = arith.divf %9, %10 : vector<16x1xf32>
    %12 = arith.mulf %7, %7 : vector<16x32xf32>
    %cst_9 = arith.constant dense<0.000000e+00> : vector<16xf32>
    %13 = vector.multi_reduction <add>, %12, %cst_9 [1] : vector<16x32xf32> to vector<16xf32>
    %14 = vector.shape_cast %13 : vector<16xf32> to vector<16x1xf32>
    %cst_10 = arith.constant 3.200000e+01 : f32
    %15 = vector.broadcast %cst_10 : f32 to vector<16x1xf32>
    %16 = arith.divf %14, %15 : vector<16x1xf32>
    %17 = arith.mulf %11, %11 : vector<16x1xf32>
    %18 = arith.subf %16, %17 : vector<16x1xf32>
    %cst_11 = arith.constant 0.000000e+00 : f32
    %19 = vector.broadcast %cst_11 : f32 to vector<16x1xf32>
    %20 = arith.maximumf %18, %19 : vector<16x1xf32>
    %c0_12 = arith.constant 0 : index
    %c0_13 = arith.constant 0 : index
    %21 = vector.load %arg5[%c0_12, %c0_13] : memref<1x32xf32, #tpu.memory_space<vmem>>, vector<1x32xf32>
    %cst_14 = arith.constant 9.99999996E-13 : f32
    %22 = vector.broadcast %cst_14 : f32 to vector<16x1xf32>
    %23 = arith.addf %20, %22 : vector<16x1xf32>
    %24 = math.rsqrt %23 : vector<16x1xf32>
    %25 = vector.broadcast %21 : vector<1x32xf32> to vector<16x32xf32>
    %26 = vector.broadcast %24 : vector<16x1xf32> to vector<16x32xf32>
    %27 = arith.mulf %25, %26 : vector<16x32xf32>
    %28 = vector.broadcast %11 : vector<16x1xf32> to vector<16x32xf32>
    %29 = arith.subf %7, %28 : vector<16x32xf32>
    %30 = arith.mulf %29, %27 : vector<16x32xf32>
    %c0_15 = arith.constant 0 : index
    %c0_16 = arith.constant 0 : index
    %31 = vector.load %arg6[%c0_15, %c0_16] : memref<1x32xf32, #tpu.memory_space<vmem>>, vector<1x32xf32>
    %32 = vector.broadcast %31 : vector<1x32xf32> to vector<16x32xf32>
    %33 = arith.addf %30, %32 : vector<16x32xf32>
    %c0_17 = arith.constant 0 : index
    %c0_18 = arith.constant 0 : index
    %34 = vector.load %arg7[%c0_17, %c0_18] : memref<16x32xf32, #tpu.memory_space<vmem>>, vector<16x32xf32>
    tpu.vector_store %arg7[%c0_17, %c0_18], %33 {strides = array<i32>} : memref<16x32xf32, #tpu.memory_space<vmem>>, vector<16x32xf32>,
    return
  }
  func.func @transform_0(%arg0: i32) -> (i32, i32) {
    %c0_i32 = arith.constant 0 : i32
    %c0_i32_0 = arith.constant 0 : i32
    return %arg0, %c0_i32 : i32, i32
  }
  func.func @transform_1(%arg0: i32) -> (i32, i32) {
    %c0_i32 = arith.constant 0 : i32
    %c0_i32_0 = arith.constant 0 : i32
    return %arg0, %c0_i32 : i32, i32
  }
  func.func @transform_2(%arg0: i32) -> (i32, i32) {
    %c0_i32 = arith.constant 0 : i32
    %c0_i32_0 = arith.constant 0 : i32
    %c0_i32_1 = arith.constant 0 : i32
    return %c0_i32, %c0_i32_0 : i32, i32
  }
  func.func @transform_3(%arg0: i32) -> (i32, i32) {
    %c0_i32 = arith.constant 0 : i32
    %c0_i32_0 = arith.constant 0 : i32
    %c0_i32_1 = arith.constant 0 : i32
    return %c0_i32, %c0_i32_0 : i32, i32
  }
  func.func @transform_4(%arg0: i32) -> (i32, i32) {
    %c0_i32 = arith.constant 0 : i32
    %c0_i32_0 = arith.constant 0 : i32
    %c0_i32_1 = arith.constant 0 : i32
    return %c0_i32, %c0_i32_0 : i32, i32
  }
  func.func @transform_5(%arg0: i32) -> (i32, i32) {
    %c0_i32 = arith.constant 0 : i32
    %c0_i32_0 = arith.constant 0 : i32
    %c0_i32_1 = arith.constant 0 : i32
    return %c0_i32, %c0_i32_0 : i32, i32
  }
  func.func @transform_6(%arg0: i32) -> (i32, i32) {
    %c0_i32 = arith.constant 0 : i32
    %c0_i32_0 = arith.constant 0 : i32
    return %arg0, %c0_i32 : i32, i32
  }
}

</mosaic_0001>

<llo_original>
// kernel: tpu_custom_call.1
$region0: #{tpu_custom_call.1}
  #allocation0 [shape = 'u32[]', space=smem, size = 0x4, offset = 0x4, fixed_abs, tag = 'smem constant byte address 0x4 - core index']
  #allocation1 [shape = 'u32[144,128]{1,0:T(1,128)}', space=vmem, size = 0x12000, scoped, tag = 'internal scratch']
  %s0 = inlined_call_operand.hbm [shape: f32[16,32], index: 0, kind: input, shape index: {}]
  %s1 = inlined_call_operand.hbm [shape: f32[16,32], index: 1, kind: input, shape index: {}]
  %s2 = inlined_call_operand.hbm [shape: f32[32,32], index: 2, kind: input, shape index: {}]
  %s3 = inlined_call_operand.vmem [shape: f32[1,32], index: 3, kind: input, shape index: {}]
  %s4 = inlined_call_operand.vmem [shape: f32[1,32], index: 4, kind: input, shape index: {}]
  %s5 = inlined_call_operand.vmem [shape: f32[1,32], index: 5, kind: input, shape index: {}]
  %s6 = inlined_call_operand.hbm [shape: f32[16,32], index: 6, kind: output, shape index: {}]
  %s7 = sld [smem:[#allocation0]]
  $region46: #{tpu_custom_call.1} parent=0
    _
  %s9 = ssub.s32 1, %s7
  %s10 = scalar_select 0, %s9, %s7
  $region1: #{tpu_custom_call.1} parent=0
    #allocation2 [shape = 'u8[8192]{0}', space=vmem, size = 0x2000, scoped, tag = 'input window, operand 0, single buffered']
    #allocation3 [shape = 's32[1]{0}', space=sflag, size = 0x4, scoped, tag = 'scoped memory for tpu_custom_call.1']
    #allocation4 [shape = 's32[1]{0}', space=sflag, size = 0x4, scoped, tag = 'scoped memory for tpu_custom_call.1']
    #allocation5 [shape = 'u8[8192]{0}', space=vmem, size = 0x2000, scoped, tag = 'input window, operand 1, single buffered']
    #allocation6 [shape = 's32[1]{0}', space=sflag, size = 0x4, scoped, tag = 'scoped memory for tpu_custom_call.1']
    #allocation7 [shape = 'u8[16384]{0}', space=vmem, size = 0x4000, scoped, tag = 'input window, operand 2, single buffered']
    #allocation8 [shape = 'u8[8192]{0}', space=vmem, size = 0x2000, scoped, tag = 'output window, operand 0, single buffered']
    %11 = vsyncpa [#allocation3], 0
    %12 = vsyncpa [#allocation6], 0
    %13 = vsyncpa [#allocation4], 0
    // Predicated region
    $region2: #{tpu_custom_call.1} parent=1 // pred_check
      _
    $region3: #{tpu_custom_call.1} parent=1 // pred_check_branch
      %15 = sbr.rel (0) target = $region5
    $region4: #{tpu_custom_call.1} parent=1 // pred_region
      %s17 = ssub.s32 256, 256
      %18 = vsyncadd [#allocation3], %s17
      %s19 = sshll.u32 [#allocation2], 4
      %s20 = int_to_ptr.vmem [resolvable:$true] %s19
      %25 = dma.hbm_to_vmem [thread:$0]  %s0, 256, %s20, [#allocation3], 128, 128, 8
    $region5: #{tpu_custom_call.1} parent=1 // pred_fallthru
      _
    // Predicated region
    $region6: #{tpu_custom_call.1} parent=1 // pred_check
      _
    $region7: #{tpu_custom_call.1} parent=1 // pred_check_branch
      %27 = sbr.rel (0) target = $region9
    $region8: #{tpu_custom_call.1} parent=1 // pred_region
      %s29 = ssub.s32 256, 256
      %30 = vsyncadd [#allocation6], %s29
      %s31 = sshll.u32 [#allocation5], 4
      %s32 = int_to_ptr.vmem [resolvable:$true] %s31
      %37 = dma.hbm_to_vmem [thread:$0]  %s1, 256, %s32, [#allocation6], 128, 128, 8
    $region9: #{tpu_custom_call.1} parent=1 // pred_fallthru
      _
    // Predicated region
    $region10: #{tpu_custom_call.1} parent=1 // pred_check
      _
    $region11: #{tpu_custom_call.1} parent=1 // pred_check_branch
      %39 = sbr.rel (0) target = $region13
    $region12: #{tpu_custom_call.1} parent=1 // pred_region
      %s41 = ssub.s32 512, 512
      %42 = vsyncadd [#allocation6], %s41
      %s43 = sshll.u32 [#allocation7], 4
      %s44 = int_to_ptr.vmem [resolvable:$true] %s43
      %49 = dma.hbm_to_vmem [thread:$0]  %s2, 512, %s44, [#allocation6], 128, 128, 8
    $region13: #{tpu_custom_call.1} parent=1 // pred_fallthru
      _
    // Predicated region
    $region14: #{tpu_custom_call.1} parent=1 // pred_check
      _
    $region15: #{tpu_custom_call.1} parent=1 // pred_check_branch
      %51 = sbr.rel (0) target = $region17
    $region16: #{tpu_custom_call.1} parent=1 // pred_region
      _
    $region17: #{tpu_custom_call.1} parent=1 // pred_fallthru
      _
    // Predicated region
    $region18: #{tpu_custom_call.1} parent=1 // pred_check
      _
    $region19: #{tpu_custom_call.1} parent=1 // pred_check_branch
      %53 = sbr.rel (0) target = $region21
    $region20: #{tpu_custom_call.1} parent=1 // pred_region
      _
    $region21: #{tpu_custom_call.1} parent=1 // pred_fallthru
      _
    // Predicated region
    $region22: #{tpu_custom_call.1} parent=1 // pred_check
      _
    $region23: #{tpu_custom_call.1} parent=1 // pred_check_branch
      %55 = sbr.rel (0) target = $region25
    $region24: #{tpu_custom_call.1} parent=1 // pred_region
      _
    $region25: #{tpu_custom_call.1} parent=1 // pred_fallthru
      _
    // Predicated region
    $region26: #{tpu_custom_call.1} parent=1 // pred_check
      _
    $region27: #{tpu_custom_call.1} parent=1 // pred_check_branch
      %57 = sbr.rel (0) target = $region29
    $region28: #{tpu_custom_call.1} parent=1 // pred_region
      %58 = dma.done [#allocation3], 256
    $region29: #{tpu_custom_call.1} parent=1 // pred_fallthru
      _
    // Predicated region
    $region30: #{tpu_custom_call.1} parent=1 // pred_check
      _
    $region31: #{tpu_custom_call.1} parent=1 // pred_check_branch
      %60 = sbr.rel (0) target = $region33
    $region32: #{tpu_custom_call.1} parent=1 // pred_region
      %61 = dma.done [#allocation6], 256
    $region33: #{tpu_custom_call.1} parent=1 // pred_fallthru
      _
    // Predicated region
    $region34: #{tpu_custom_call.1} parent=1 // pred_check
      _
    $region35: #{tpu_custom_call.1} parent=1 // pred_check_branch
      %63 = sbr.rel (0) target = $region37
    $region36: #{tpu_custom_call.1} parent=1 // pred_region
      %64 = dma.done [#allocation6], 512
    $region37: #{tpu_custom_call.1} parent=1 // pred_fallthru
      _
    %v65 = vld [vmem:[#allocation2] sm:$0xff]
    %v66 = vld [vmem:[#allocation2 + $0x8] sm:$0xff]
    %v67 = vld [vmem:[#allocation7] sm:$0xff]
    %v68 = vld [vmem:[#allocation7 + $0x8] sm:$0xff]
    %v69 = vld [vmem:[#allocation7 + $0x10] sm:$0xff]
    %v70 = vld [vmem:[#allocation7 + $0x18] sm:$0xff]
    %v71 = vld [vmem:[%s3] sm:$0x1]
    %v73 = vlaneseq
    %v74 = vshrl.u32 %v73, 7
    %v75 = vsub.s32 0, %v74
    %v76 = vrot.slane %v71, %v75
    %vm78 = vcmask 261120
    %v80 = vsel %vm78, %v65, 0
    %v83 = vsel %vm78, %v66, 0
    %85 = vmatprep.subr.mxu0 0.0
    %86 = vmatpush1.msra.mxu0 %v67
    %87 = vmatprep.subr.mxu0 0.0
    %88 = vmatpush1.msra.mxu0 %v68
    %89 = vmatprep.subr.mxu0 0.0
    %90 = vmatpush1.msra.mxu0 %v69
    %91 = vmatprep.subr.mxu0 0.0
    %92 = vmatpush1.msra.mxu0 %v70
    %93 = vmatprep.subr.mxu0 0.0
    %94 = vmatpush1.msra.mxu0 0.0
    %95 = vmatprep.subr.mxu0 0.0
    %96 = vmatpush1.msra.mxu0 0.0
    %97 = vmatprep.subr.mxu0 0.0
    %98 = vmatpush1.msra.mxu0 0.0
    %99 = vmatprep.subr.mxu0 0.0
    %100 = vmatpush1.msra.mxu0 0.0
    %101 = vmatprep.subr.mxu0 0.0
    %102 = vmatpush1.msra.mxu0 0.0
    %103 = vmatprep.subr.mxu0 0.0
    %104 = vmatpush1.msra.mxu0 0.0
    %105 = vmatprep.subr.mxu0 0.0
    %106 = vmatpush1.msra.mxu0 0.0
    %107 = vmatprep.subr.mxu0 0.0
    %108 = vmatpush1.msra.mxu0 0.0
    %109 = vmatprep.subr.mxu0 0.0
    %110 = vmatpush1.msra.mxu0 0.0
    %111 = vmatprep.subr.mxu0 0.0
    %112 = vmatpush1.msra.mxu0 0.0
    %113 = vmatprep.subr.mxu0 0.0
    %114 = vmatpush1.msra.mxu0 0.0
    %115 = vmatprep.subr.mxu0 0.0
    %116 = vmatpush1.msra.mxu0 0.0
    %117 = vmatprep.subr.mxu0 0.0
    %118 = vmatpush1.msra.mxu0 0.0
    %119 = vmatprep.subr.mxu0 0.0
    %120 = vmatpush1.msra.mxu0 0.0
    %121 = vmatprep.subr.mxu0 0.0
    %122 = vmatpush1.msra.mxu0 0.0
    %123 = vmatprep.subr.mxu0 0.0
    %124 = vmatpush1.msra.mxu0 0.0
    %125 = vmatprep.subr.mxu0 0.0
    %126 = vmatpush1.msra.mxu0 0.0
    %127 = vmatprep.subr.mxu0 0.0
    %128 = vmatpush1.msra.mxu0 0.0
    %129 = vmatprep.subr.mxu0 0.0
    %130 = vmatpush1.msra.mxu0 0.0
    %131 = vmatprep.subr.mxu0 0.0
    %132 = vmatpush1.msra.mxu0 0.0
    %133 = vmatprep.subr.mxu0 0.0
    %134 = vmatpush1.msra.mxu0 0.0
    %135 = vmatprep.subr.mxu0 0.0
    %136 = vmatpush1.msra.mxu0 0.0
    %137 = vmatprep.subr.mxu0 0.0
    %138 = vmatpush1.msra.mxu0 0.0
    %139 = vmatprep.subr.mxu0 0.0
    %140 = vmatpush1.msra.mxu0 0.0
    %141 = vmatprep.subr.mxu0 0.0
    %142 = vmatpush1.msra.mxu0 0.0
    %143 = vmatprep.subr.mxu0 0.0
    %144 = vmatpush1.msra.mxu0 0.0
    %145 = vmatprep.subr.mxu0 0.0
    %146 = vmatpush1.msra.mxu0 0.0
    %147 = vmatprep.subr.mxu0 0.0
    %148 = vmatpush1.msra.mxu0 0.0
    %149 = vmatprep.mubr.f32.mxu0 0.0
    %150 = vmatmul.mubr.f32.gmra.mrb[0].mxu0 %v80
    %v151 = vpop.f32.mrb[0].mxu0
    %v152 = vadd.f32 %v76, %v151
    %v153 = vpop.f32.mrb[0].mxu0
    %154 = vmatprep.mubr.f32.mxu0 0.0
    %155 = vmatmul.mubr.f32.gmra.mrb[0].mxu0 %v83
    %v156 = vpop.f32.mrb[0].mxu0
    %v157 = vadd.f32 %v76, %v156
    %v158 = vpop.f32.mrb[0].mxu0
    %159 = vdwg.mxu0
    %v160 = vld [vmem:[#allocation5] sm:$0xff]
    %v161 = vld [vmem:[#allocation5 + $0x8] sm:$0xff]
    %v162 = vadd.f32 %v152, %v160
    %v163 = vadd.f32 %v157, %v161
    %v164 = vsel %vm78, %v162, 0.0
    %165 = vadd.xlane.f32.xlu0 %v164
    %v166 = vpop.xlane.xlu0 %165
    %v167 = vsel %vm78, %v163, 0.0
    %168 = vadd.xlane.f32.xlu0 %v167
    %v169 = vpop.xlane.xlu0 %168
    %v170 = vrcp.pop 32.0
    %v171 = vmul.f32 %v166, %v170
    %v172 = vmul.f32 %v169, %v170
    %v173 = vmul.f32 %v162, %v162
    %v174 = vmul.f32 %v163, %v163
    %v175 = vsel %vm78, %v173, 0.0
    %176 = vadd.xlane.f32.xlu0 %v175
    %v177 = vpop.xlane.xlu0 %176
    %v178 = vsel %vm78, %v174, 0.0
    %179 = vadd.xlane.f32.xlu0 %v178
    %v180 = vpop.xlane.xlu0 %179
    %v181 = vmul.f32 %v177, %v170
    %v182 = vmul.f32 %v180, %v170
    %v183 = vmul.f32 %v171, %v171
    %v184 = vmul.f32 %v172, %v172
    %v185 = vsub.f32 %v181, %v183
    %v186 = vsub.f32 %v182, %v184
    %v187 = vmax.f32 %v185, 0.0
    %v188 = vmax.f32 %v186, 0.0
    %v189 = vld [vmem:[%s4] sm:$0x1]
    %v190 = vadd.f32 %v187, 1e-12
    %v191 = vadd.f32 %v188, 1e-12
    %v192 = vrsqrt.pop %v190
    %v193 = vrsqrt.pop %v191
    %v195 = vlaneseq
    %v196 = vshrl.u32 %v195, 7
    %v197 = vsub.s32 0, %v196
    %v198 = vrot.slane %v189, %v197
    %v200 = vmul.f32 %v198, %v192
    %v201 = vmul.f32 %v198, %v193
    %v202 = vsub.f32 %v162, %v171
    %v203 = vsub.f32 %v163, %v172
    %v204 = vmul.f32 %v202, %v200
    %v205 = vmul.f32 %v203, %v201
    %v206 = vld [vmem:[%s5] sm:$0x1]
    %v208 = vlaneseq
    %v209 = vshrl.u32 %v208, 7
    %v210 = vsub.s32 0, %v209
    %v211 = vrot.slane %v206, %v210
    %v213 = vadd.f32 %v204, %v211
    %v214 = vadd.f32 %v205, %v211
    %215 = vst.msk [vmem:[#allocation8] sm:$0xff] %vm78, %v213
    %216 = vst.msk [vmem:[#allocation8 + $0x8] sm:$0xff] %vm78, %v214
    // Predicated region
    $region38: #{tpu_custom_call.1} parent=1 // pred_check
      _
    $region39: #{tpu_custom_call.1} parent=1 // pred_check_branch
      %218 = sbr.rel (0) target = $region41
    $region40: #{tpu_custom_call.1} parent=1 // pred_region
      %s220 = ssub.s32 256, 256
      %221 = vsyncadd [#allocation4], %s220
      %s222 = sshll.u32 [#allocation8], 4
      %s223 = int_to_ptr.vmem [resolvable:$true] %s222
      %228 = dma.vmem_to_hbm [thread:$0]  %s223, 256, %s6, [#allocation4], 128, 128, 8
    $region41: #{tpu_custom_call.1} parent=1 // pred_fallthru
      _
    // Predicated region
    $region42: #{tpu_custom_call.1} parent=1 // pred_check
      _
    $region43: #{tpu_custom_call.1} parent=1 // pred_check_branch
      %230 = sbr.rel (0) target = $region45
    $region44: #{tpu_custom_call.1} parent=1 // pred_region
      %231 = dma.done [#allocation4], 256
    $region45: #{tpu_custom_call.1} parent=1 // pred_fallthru
      _
    %232 = vsyncpa [#allocation3], 1
    %233 = vsyncpa [#allocation6], 1
    %234 = vsyncpa [#allocation4], 1

// kernel: tpu_custom_call.1
$region0: #{tpu_custom_call.1}
  #allocation0 [shape = 'u32[]', space=smem, size = 0x4, offset = 0x4, fixed_abs, tag = 'smem constant byte address 0x4 - core index']
  #allocation1 [shape = 'u32[144,128]{1,0:T(1,128)}', space=vmem, size = 0x12000, scoped, tag = 'internal scratch']
  %s0 = inlined_call_operand.hbm [shape: f32[16,32], index: 0, kind: input, shape index: {}]
  %s1 = inlined_call_operand.hbm [shape: f32[16,32], index: 1, kind: input, shape index: {}]
  %s2 = inlined_call_operand.hbm [shape: f32[32,32], index: 2, kind: input, shape index: {}]
  %s3 = inlined_call_operand.vmem [shape: f32[1,32], index: 3, kind: input, shape index: {}]
  %s4 = inlined_call_operand.vmem [shape: f32[1,32], index: 4, kind: input, shape index: {}]
  %s5 = inlined_call_operand.vmem [shape: f32[1,32], index: 5, kind: input, shape index: {}]
  %s6 = inlined_call_operand.hbm [shape: f32[16,32], index: 6, kind: output, shape index: {}]
  %s7 = sld [smem:[#allocation0]]
  $region46: #{tpu_custom_call.1} parent=0
    _
  %s9 = ssub.s32 1, %s7
  %s10 = scalar_select 0, %s9, %s7
  $region1: #{tpu_custom_call.1} parent=0
    #allocation2 [shape = 'u8[8192]{0}', space=vmem, size = 0x2000, scoped, tag = 'input window, operand 0, single buffered']
    #allocation3 [shape = 's32[1]{0}', space=sflag, size = 0x4, scoped, tag = 'scoped memory for tpu_custom_call.1']
    #allocation4 [shape = 's32[1]{0}', space=sflag, size = 0x4, scoped, tag = 'scoped memory for tpu_custom_call.1']
    #allocation5 [shape = 'u8[8192]{0}', space=vmem, size = 0x2000, scoped, tag = 'input window, operand 1, single buffered']
    #allocation6 [shape = 's32[1]{0}', space=sflag, size = 0x4, scoped, tag = 'scoped memory for tpu_custom_call.1']
    #allocation7 [shape = 'u8[16384]{0}', space=vmem, size = 0x4000, scoped, tag = 'input window, operand 2, single buffered']
    #allocation8 [shape = 'u8[8192]{0}', space=vmem, size = 0x2000, scoped, tag = 'output window, operand 0, single buffered']
    %11 = vsyncpa [#allocation3], 0
    %12 = vsyncpa [#allocation6], 0
    %13 = vsyncpa [#allocation4], 0
    // Predicated region
    $region2: #{tpu_custom_call.1} parent=1 // pred_check
      _
    $region3: #{tpu_custom_call.1} parent=1 // pred_check_branch
      %15 = sbr.rel (0) target = $region5
    $region4: #{tpu_custom_call.1} parent=1 // pred_region
      %s17 = ssub.s32 256, 256
      %18 = vsyncadd [#allocation3], %s17
      %s19 = sshll.u32 [#allocation2], 4
      %s20 = int_to_ptr.vmem [resolvable:$true] %s19
      %25 = dma.hbm_to_vmem [thread:$0]  %s0, 256, %s20, [#allocation3], 128, 128, 8
    $region5: #{tpu_custom_call.1} parent=1 // pred_fallthru
      _
    // Predicated region
    $region6: #{tpu_custom_call.1} parent=1 // pred_check
      _
    $region7: #{tpu_custom_call.1} parent=1 // pred_check_branch
      %27 = sbr.rel (0) target = $region9
    $region8: #{tpu_custom_call.1} parent=1 // pred_region
      %s29 = ssub.s32 256, 256
      %30 = vsyncadd [#allocation6], %s29
      %s31 = sshll.u32 [#allocation5], 4
      %s32 = int_to_ptr.vmem [resolvable:$true] %s31
      %37 = dma.hbm_to_vmem [thread:$0]  %s1, 256, %s32, [#allocation6], 128, 128, 8
    $region9: #{tpu_custom_call.1} parent=1 // pred_fallthru
      _
    // Predicated region
    $region10: #{tpu_custom_call.1} parent=1 // pred_check
      _
    $region11: #{tpu_custom_call.1} parent=1 // pred_check_branch
      %39 = sbr.rel (0) target = $region13
    $region12: #{tpu_custom_call.1} parent=1 // pred_region
      %s41 = ssub.s32 512, 512
      %42 = vsyncadd [#allocation6], %s41
      %s43 = sshll.u32 [#allocation7], 4
      %s44 = int_to_ptr.vmem [resolvable:$true] %s43
      %49 = dma.hbm_to_vmem [thread:$0]  %s2, 512, %s44, [#allocation6], 128, 128, 8
    $region13: #{tpu_custom_call.1} parent=1 // pred_fallthru
      _
    // Predicated region
    $region14: #{tpu_custom_call.1} parent=1 // pred_check
      _
    $region15: #{tpu_custom_call.1} parent=1 // pred_check_branch
      %51 = sbr.rel (0) target = $region17
    $region16: #{tpu_custom_call.1} parent=1 // pred_region
      _
    $region17: #{tpu_custom_call.1} parent=1 // pred_fallthru
      _
    // Predicated region
    $region18: #{tpu_custom_call.1} parent=1 // pred_check
      _
    $region19: #{tpu_custom_call.1} parent=1 // pred_check_branch
      %53 = sbr.rel (0) target = $region21
    $region20: #{tpu_custom_call.1} parent=1 // pred_region
      _
    $region21: #{tpu_custom_call.1} parent=1 // pred_fallthru
      _
    // Predicated region
    $region22: #{tpu_custom_call.1} parent=1 // pred_check
      _
    $region23: #{tpu_custom_call.1} parent=1 // pred_check_branch
      %55 = sbr.rel (0) target = $region25
    $region24: #{tpu_custom_call.1} parent=1 // pred_region
      _
    $region25: #{tpu_custom_call.1} parent=1 // pred_fallthru
      _
    // Predicated region
    $region26: #{tpu_custom_call.1} parent=1 // pred_check
      _
    $region27: #{tpu_custom_call.1} parent=1 // pred_check_branch
      %57 = sbr.rel (0) target = $region29
    $region28: #{tpu_custom_call.1} parent=1 // pred_region
      %58 = dma.done [#allocation3], 256
    $region29: #{tpu_custom_call.1} parent=1 // pred_fallthru
      _
    // Predicated region
    $region30: #{tpu_custom_call.1} parent=1 // pred_check
      _
    $region31: #{tpu_custom_call.1} parent=1 // pred_check_branch
      %60 = sbr.rel (0) target = $region33
    $region32: #{tpu_custom_call.1} parent=1 // pred_region
      %61 = dma.done [#allocation6], 256
    $region33: #{tpu_custom_call.1} parent=1 // pred_fallthru
      _
    // Predicated region
    $region34: #{tpu_custom_call.1} parent=1 // pred_check
      _
    $region35: #{tpu_custom_call.1} parent=1 // pred_check_branch
      %63 = sbr.rel (0) target = $region37
    $region36: #{tpu_custom_call.1} parent=1 // pred_region
      %64 = dma.done [#allocation6], 512
    $region37: #{tpu_custom_call.1} parent=1 // pred_fallthru
      _
    %v65 = vld [vmem:[#allocation2] sm:$0xff]
    %v66 = vld [vmem:[#allocation2 + $0x8] sm:$0xff]
    %v67 = vld [vmem:[#allocation7] sm:$0xff]
    %v68 = vld [vmem:[#allocation7 + $0x8] sm:$0xff]
    %v69 = vld [vmem:[#allocation7 + $0x10] sm:$0xff]
    %v70 = vld [vmem:[#allocation7 + $0x18] sm:$0xff]
    %v71 = vld [vmem:[%s3] sm:$0x1]
    %v73 = vlaneseq
    %v74 = vshrl.u32 %v73, 7
    %v75 = vsub.s32 0, %v74
    %v76 = vrot.slane %v71, %v75
    %vm78 = vcmask 261120
    %v80 = vsel %vm78, %v65, 0
    %v83 = vsel %vm78, %v66, 0
    %85 = vmatprep.subr.mxu0 0.0
    %86 = vmatpush1.msra.mxu0 %v67
    %87 = vmatprep.subr.mxu0 0.0
    %88 = vmatpush1.msra.mxu0 %v68
    %89 = vmatprep.subr.mxu0 0.0
    %90 = vmatpush1.msra.mxu0 %v69
    %91 = vmatprep.subr.mxu0 0.0
    %92 = vmatpush1.msra.mxu0 %v70
    %93 = vmatprep.subr.mxu0 0.0
    %94 = vmatpush1.msra.mxu0 0.0
    %95 = vmatprep.subr.mxu0 0.0
    %96 = vmatpush1.msra.mxu0 0.0
    %97 = vmatprep.subr.mxu0 0.0
    %98 = vmatpush1.msra.mxu0 0.0
    %99 = vmatprep.subr.mxu0 0.0
    %100 = vmatpush1.msra.mxu0 0.0
    %101 = vmatprep.subr.mxu0 0.0
    %102 = vmatpush1.msra.mxu0 0.0
    %103 = vmatprep.subr.mxu0 0.0
    %104 = vmatpush1.msra.mxu0 0.0
    %105 = vmatprep.subr.mxu0 0.0
    %106 = vmatpush1.msra.mxu0 0.0
    %107 = vmatprep.subr.mxu0 0.0
    %108 = vmatpush1.msra.mxu0 0.0
    %109 = vmatprep.subr.mxu0 0.0
    %110 = vmatpush1.msra.mxu0 0.0
    %111 = vmatprep.subr.mxu0 0.0
    %112 = vmatpush1.msra.mxu0 0.0
    %113 = vmatprep.subr.mxu0 0.0
    %114 = vmatpush1.msra.mxu0 0.0
    %115 = vmatprep.subr.mxu0 0.0
    %116 = vmatpush1.msra.mxu0 0.0
    %117 = vmatprep.subr.mxu0 0.0
    %118 = vmatpush1.msra.mxu0 0.0
    %119 = vmatprep.subr.mxu0 0.0
    %120 = vmatpush1.msra.mxu0 0.0
    %121 = vmatprep.subr.mxu0 0.0
    %122 = vmatpush1.msra.mxu0 0.0
    %123 = vmatprep.subr.mxu0 0.0
    %124 = vmatpush1.msra.mxu0 0.0
    %125 = vmatprep.subr.mxu0 0.0
    %126 = vmatpush1.msra.mxu0 0.0
    %127 = vmatprep.subr.mxu0 0.0
    %128 = vmatpush1.msra.mxu0 0.0
    %129 = vmatprep.subr.mxu0 0.0
    %130 = vmatpush1.msra.mxu0 0.0
    %131 = vmatprep.subr.mxu0 0.0
    %132 = vmatpush1.msra.mxu0 0.0
    %133 = vmatprep.subr.mxu0 0.0
    %134 = vmatpush1.msra.mxu0 0.0
    %135 = vmatprep.subr.mxu0 0.0
    %136 = vmatpush1.msra.mxu0 0.0
    %137 = vmatprep.subr.mxu0 0.0
    %138 = vmatpush1.msra.mxu0 0.0
    %139 = vmatprep.subr.mxu0 0.0
    %140 = vmatpush1.msra.mxu0 0.0
    %141 = vmatprep.subr.mxu0 0.0
    %142 = vmatpush1.msra.mxu0 0.0
    %143 = vmatprep.subr.mxu0 0.0
    %144 = vmatpush1.msra.mxu0 0.0
    %145 = vmatprep.subr.mxu0 0.0
    %146 = vmatpush1.msra.mxu0 0.0
    %147 = vmatprep.subr.mxu0 0.0
    %148 = vmatpush1.msra.mxu0 0.0
    %149 = vmatprep.mubr.f32.mxu0 0.0
    %150 = vmatmul.mubr.f32.gmra.mrb[0].mxu0 %v80
    %v151 = vpop.f32.mrb[0].mxu0
    %v152 = vadd.f32 %v76, %v151
    %v153 = vpop.f32.mrb[0].mxu0
    %154 = vmatprep.mubr.f32.mxu0 0.0
    %155 = vmatmul.mubr.f32.gmra.mrb[0].mxu0 %v83
    %v156 = vpop.f32.mrb[0].mxu0
    %v157 = vadd.f32 %v76, %v156
    %v158 = vpop.f32.mrb[0].mxu0
    %159 = vdwg.mxu0
    %v160 = vld [vmem:[#allocation5] sm:$0xff]
    %v161 = vld [vmem:[#allocation5 + $0x8] sm:$0xff]
    %v162 = vadd.f32 %v152, %v160
    %v163 = vadd.f32 %v157, %v161
    %v164 = vsel %vm78, %v162, 0.0
    %165 = vadd.xlane.f32.xlu0 %v164
    %v166 = vpop.xlane.xlu0 %165
    %v167 = vsel %vm78, %v163, 0.0
    %168 = vadd.xlane.f32.xlu0 %v167
    %v169 = vpop.xlane.xlu0 %168
    %v170 = vrcp.pop 32.0
    %v171 = vmul.f32 %v166, %v170
    %v172 = vmul.f32 %v169, %v170
    %v173 = vmul.f32 %v162, %v162
    %v174 = vmul.f32 %v163, %v163
    %v175 = vsel %vm78, %v173, 0.0
    %176 = vadd.xlane.f32.xlu0 %v175
    %v177 = vpop.xlane.xlu0 %176
    %v178 = vsel %vm78, %v174, 0.0
    %179 = vadd.xlane.f32.xlu0 %v178
    %v180 = vpop.xlane.xlu0 %179
    %v181 = vmul.f32 %v177, %v170
    %v182 = vmul.f32 %v180, %v170
    %v183 = vmul.f32 %v171, %v171
    %v184 = vmul.f32 %v172, %v172
    %v185 = vsub.f32 %v181, %v183
    %v186 = vsub.f32 %v182, %v184
    %v187 = vmax.f32 %v185, 0.0
    %v188 = vmax.f32 %v186, 0.0
    %v189 = vld [vmem:[%s4] sm:$0x1]
    %v190 = vadd.f32 %v187, 1e-12
    %v191 = vadd.f32 %v188, 1e-12
    %v192 = vrsqrt.pop %v190
    %v193 = vrsqrt.pop %v191
    %v195 = vlaneseq
    %v196 = vshrl.u32 %v195, 7
    %v197 = vsub.s32 0, %v196
    %v198 = vrot.slane %v189, %v197
    %v200 = vmul.f32 %v198, %v192
    %v201 = vmul.f32 %v198, %v193
    %v202 = vsub.f32 %v162, %v171
    %v203 = vsub.f32 %v163, %v172
    %v204 = vmul.f32 %v202, %v200
    %v205 = vmul.f32 %v203, %v201
    %v206 = vld [vmem:[%s5] sm:$0x1]
    %v208 = vlaneseq
    %v209 = vshrl.u32 %v208, 7
    %v210 = vsub.s32 0, %v209
    %v211 = vrot.slane %v206, %v210
    %v213 = vadd.f32 %v204, %v211
    %v214 = vadd.f32 %v205, %v211
    %215 = vst.msk [vmem:[#allocation8] sm:$0xff] %vm78, %v213
    %216 = vst.msk [vmem:[#allocation8 + $0x8] sm:$0xff] %vm78, %v214
    // Predicated region
    $region38: #{tpu_custom_call.1} parent=1 // pred_check
      _
    $region39: #{tpu_custom_call.1} parent=1 // pred_check_branch
      %218 = sbr.rel (0) target = $region41
    $region40: #{tpu_custom_call.1} parent=1 // pred_region
      %s220 = ssub.s32 256, 256
      %221 = vsyncadd [#allocation4], %s220
      %s222 = sshll.u32 [#allocation8], 4
      %s223 = int_to_ptr.vmem [resolvable:$true] %s222
      %228 = dma.vmem_to_hbm [thread:$0]  %s223, 256, %s6, [#allocation4], 128, 128, 8
    $region41: #{tpu_custom_call.1} parent=1 // pred_fallthru
      _
    // Predicated region
    $region42: #{tpu_custom_call.1} parent=1 // pred_check
      _
    $region43: #{tpu_custom_call.1} parent=1 // pred_check_branch
      %230 = sbr.rel (0) target = $region45
    $region44: #{tpu_custom_call.1} parent=1 // pred_region
      %231 = dma.done [#allocation4], 256
    $region45: #{tpu_custom_call.1} parent=1 // pred_fallthru
      _
    %232 = vsyncpa [#allocation3], 1
    %233 = vsyncpa [#allocation6], 1
    %234 = vsyncpa [#allocation4], 1

</llo_original>
